<compile_context>
chip_gen: v7x
topology: tpu7x:2x2x1
jax: 0.10.0
libtpu: 0.0.40
codegen_flags: <defaults>
</compile_context>

<pallas_src>
import functools

import jax
import jax.numpy as jnp
import numpy as np
from jax.experimental import pallas as pl
from jax.experimental.pallas import tpu as pltpu

EPS = 1e-5


def _vmem_capacity_bytes():
    """Physical VMEM of the local TPU (falls back to the v7x 64 MiB floor)."""
    try:
        return int(pltpu.get_tpu_info().vmem_capacity_bytes)
    except Exception:
        return 64 * 1024 * 1024


def _pick_tk(C, HW, elt_bytes, tile_budget_bytes):
    """Largest lane-dense spatial tile s.t. double-buffered in+out tiles fit."""
    per_col = max(1, 4 * C * elt_bytes)          # (in + out) x 2 buffers, per column
    max_tk = tile_budget_bytes // per_col
    if HW <= max_tk:
        return HW                                 # whole row (== full dim, always legal)
    return max(128, (max_tk // 128) * 128)        # multiple of 128 -> unmasked stores


# -----------------------------------------------------------------------------
# Pass 1: per-(n, c) sum / sum-of-squares over the spatial axis (f32 accum).
# -----------------------------------------------------------------------------
def _stats_kernel(x_ref, sum_ref, ssq_ref, *, hw, tk):
    k = pl.program_id(1)

    @pl.when(k == 0)
    def _init():
        sum_ref[...] = jnp.zeros_like(sum_ref)
        ssq_ref[...] = jnp.zeros_like(ssq_ref)

    x = x_ref[...].astype(jnp.float32)                        # (1, C, TK)
    if hw % tk != 0:                                          # static (trace-time) branch
        col = k * tk + jax.lax.broadcasted_iota(jnp.int32, x.shape, 2)
        x = jnp.where(col < hw, x, 0.0)
    sum_ref[...] += jnp.sum(x, axis=2, keepdims=True)         # (1, C, 1)
    ssq_ref[...] += jnp.sum(x * x, axis=2, keepdims=True)


def _spatial_partial_stats(x3, tk, vmem_limit):
    N, C, HW = x3.shape
    kt = pl.cdiv(HW, tk)
    sums, ssqs = pl.pallas_call(
        functools.partial(_stats_kernel, hw=HW, tk=tk),
        out_shape=(
            jax.ShapeDtypeStruct((N, C, 1), jnp.float32),
            jax.ShapeDtypeStruct((N, C, 1), jnp.float32),
        ),
        grid=(N, kt),
        in_specs=[pl.BlockSpec((1, C, tk), lambda n, k: (n, 0, k))],
        out_specs=(
            pl.BlockSpec((1, C, 1), lambda n, k: (n, 0, 0)),
            pl.BlockSpec((1, C, 1), lambda n, k: (n, 0, 0)),
        ),
        compiler_params=pltpu.CompilerParams(
            dimension_semantics=("parallel", "arbitrary"),
            vmem_limit_bytes=vmem_limit,
        ),
    )(x3)
    return sums[..., 0], ssqs[..., 0]             # (N, C) f32 each


# -----------------------------------------------------------------------------
# Pass 2: y = x * scale[n, c] + shift[n, c], written straight to fused output.
# -----------------------------------------------------------------------------
def _norm_kernel(x_ref, scale_ref, shift_ref, o_ref):
    x = x_ref[...].astype(jnp.float32)                        # (1, C, TK)
    y = x * scale_ref[...] + shift_ref[...]                   # (1, C, 1) broadcast
    o_ref[...] = y.astype(o_ref.dtype)


def _normalize(x3, scale_nc1, shift_nc1, tk, vmem_limit):
    N, C, HW = x3.shape
    kt = pl.cdiv(HW, tk)
    return pl.pallas_call(
        _norm_kernel,
        out_shape=jax.ShapeDtypeStruct((N, C, HW), x3.dtype),
        grid=(N, kt),
        in_specs=[
            pl.BlockSpec((1, C, tk), lambda n, k: (n, 0, k)),
            pl.BlockSpec((1, C, 1), lambda n, k: (n, 0, 0)),
            pl.BlockSpec((1, C, 1), lambda n, k: (n, 0, 0)),
        ],
        out_specs=pl.BlockSpec((1, C, tk), lambda n, k: (n, 0, k)),
        compiler_params=pltpu.CompilerParams(
            dimension_semantics=("parallel", "parallel"),
            vmem_limit_bytes=vmem_limit,
        ),
    )(x3, scale_nc1, shift_nc1)


def ibn_forward(x, params, ratio=0.5, eps=EPS):
    """IBN forward. x: (N, C, H, W) NCHW, like PyTorch."""
    N, C, H, W = x.shape
    half = int(C * ratio)
    HW = H * W

    x3 = x.reshape(N, C, HW)                      # contiguous -> free reshape

    vmem_cap = _vmem_capacity_bytes()
    vmem_limit = vmem_cap // 2                    # raise scoped limit, keep headroom
    tk = _pick_tk(C, HW, jnp.dtype(x.dtype).itemsize, vmem_limit // 2)

    # ---- pass 1: per-(n, c) partial sums (reads x once, keeps input dtype on DMA)
    s, ss = _spatial_partial_stats(x3, tk, vmem_limit)        # (N, C) f32

    # ---- tiny O(N*C) statistics combine (InstanceNorm vs BatchNorm halves)
    mean_in = s / HW
    var_in = ss / HW - mean_in * mean_in                      # biased variance

    cnt_bn = N * HW
    mean_bn = jnp.sum(s, axis=0) / cnt_bn                     # (C,)
    var_bn = jnp.sum(ss, axis=0) / cnt_bn - mean_bn * mean_bn

    is_in = (jnp.arange(C) < half)[None, :]                   # (1, C)
    mean_nc = jnp.where(is_in, mean_in, mean_bn[None, :])
    var_nc = jnp.where(is_in, var_in, var_bn[None, :])
    rstd_nc = jax.lax.rsqrt(jnp.maximum(var_nc, 0.0) + eps)

    gamma = jnp.concatenate([params["in_weight"], params["bn_weight"]]).astype(jnp.float32)
    beta = jnp.concatenate([params["in_bias"], params["bn_bias"]]).astype(jnp.float32)
    scale = rstd_nc * gamma[None, :]                          # (N, C)
    shift = beta[None, :] - mean_nc * scale

    # ---- pass 2: normalize + affine, fused output (reads x once, writes once)
    out3 = _normalize(x3, scale.reshape(N, C, 1), shift.reshape(N, C, 1), tk, vmem_limit)
    return out3.reshape(N, C, H, W)


def _ibn_reference(x, params, ratio=0.5):
    """Pure-JAX reference for correctness checking."""
    N, C, H, W = x.shape
    half = int(C * ratio)
    x1 = x[:, :half].astype(jnp.float32)
    x2 = x[:, half:].astype(jnp.float32)

    m1 = x1.mean(axis=(2, 3), keepdims=True)
    v1 = ((x1 - m1) ** 2).mean(axis=(2, 3), keepdims=True)
    o1 = (x1 - m1) / jnp.sqrt(v1 + EPS)
    o1 = o1 * params["in_weight"].reshape(1, half, 1, 1) + params["in_bias"].reshape(1, half, 1, 1)

    m2 = x2.mean(axis=(0, 2, 3), keepdims=True)
    v2 = ((x2 - m2) ** 2).mean(axis=(0, 2, 3), keepdims=True)
    o2 = (x2 - m2) / jnp.sqrt(v2 + EPS)
    c_bn = C - half
    o2 = o2 * params["bn_weight"].reshape(1, c_bn, 1, 1) + params["bn_bias"].reshape(1, c_bn, 1, 1)

    return jnp.concatenate([o1, o2], axis=1).astype(x.dtype)


if __name__ == "__main__":
    key = jax.random.PRNGKey(0)
    N, C, H, W = 2, 4, 16, 16
    ratio = 0.5
    half = int(C * ratio)
    c_bn = C - half

    k_x, k_gw, k_gb, k_bw, k_bb = jax.random.split(key, 5)
    x = jax.random.normal(k_x, (N, C, H, W), dtype=jnp.float32)

    params = {
        "in_weight": 1.0 + 0.1 * jax.random.normal(k_gw, (half,), dtype=jnp.float32),
        "in_bias": 0.1 * jax.random.normal(k_gb, (half,), dtype=jnp.float32),
        "bn_weight": 1.0 + 0.1 * jax.random.normal(k_bw, (c_bn,), dtype=jnp.float32),
        "bn_bias": 0.1 * jax.random.normal(k_bb, (c_bn,), dtype=jnp.float32),
    }

    fwd = jax.jit(lambda xx, pp: ibn_forward(xx, pp, ratio=ratio))
    out = jax.block_until_ready(fwd(x, params))

    ref = jax.block_until_ready(_ibn_reference(x, params, ratio=ratio))
    np.testing.assert_allclose(np.asarray(out), np.asarray(ref), atol=1e-4, rtol=1e-4)

    print("KERNEL_OK")
</pallas_src>

<mosaic_0001>
module attributes {stable_mosaic.version = 11 : i64} {
  func.func @_stats_kernel(%arg0: i32, %arg1: i32, %arg2: memref<1x4x256xf32, #tpu.memory_space<vmem>>, %arg3: memref<1x4x1xf32, #tpu.memory_space<vmem>>, %arg4: memref<1x4x1xf32, #tpu.memory_space<vmem>>) attributes {dimension_semantics = [#tpu.dimension_semantics<parallel>, #tpu.dimension_semantics<arbitrary>], iteration_bounds = array<i64: 2, 1>, scalar_prefetch = 0 : i64, scratch_operands = 0 : i64, tpu.core_type = #tpu.core_type<tc>, window_params = [{transform_indices = @transform_0, window_bounds = array<i64: 1, 4, 256>}, {transform_indices = @transform_1, window_bounds = array<i64: 1, 4, 1>}, {transform_indices = @transform_2, window_bounds = array<i64: 1, 4, 1>}]} {
    %c0_i32 = arith.constant 0 : i32
    %0 = arith.cmpi eq, %arg1, %c0_i32 : i32
    %1 = arith.extui %0 : i1 to i32
    %c0_i32_0 = arith.constant 0 : i32
    %2 = arith.cmpi ne, %1, %c0_i32_0 : i32
    scf.if %2 {
      %cst_16 = arith.constant 0.000000e+00 : f32
      %15 = vector.broadcast %cst_16 : f32 to vector<1x4x1xf32>
      %c0_17 = arith.constant 0 : index
      %c0_18 = arith.constant 0 : index
      %c0_19 = arith.constant 0 : index
      %16 = vector.load %arg3[%c0_17, %c0_18, %c0_19] : memref<1x4x1xf32, #tpu.memory_space<vmem>>, vector<1x4x1xf32>
      tpu.vector_store %arg3[%c0_17, %c0_18, %c0_19], %15 {strides = array<i32>} : memref<1x4x1xf32, #tpu.memory_space<vmem>>, vector<1x4x1xf32>,
      %cst_20 = arith.constant 0.000000e+00 : f32
      %17 = vector.broadcast %cst_20 : f32 to vector<1x4x1xf32>
      %c0_21 = arith.constant 0 : index
      %c0_22 = arith.constant 0 : index
      %c0_23 = arith.constant 0 : index
      %18 = vector.load %arg4[%c0_21, %c0_22, %c0_23] : memref<1x4x1xf32, #tpu.memory_space<vmem>>, vector<1x4x1xf32>
      tpu.vector_store %arg4[%c0_21, %c0_22, %c0_23], %17 {strides = array<i32>} : memref<1x4x1xf32, #tpu.memory_space<vmem>>, vector<1x4x1xf32>,
    } else {
    }
    %c0 = arith.constant 0 : index
    %c0_1 = arith.constant 0 : index
    %c0_2 = arith.constant 0 : index
    %3 = vector.load %arg2[%c0, %c0_1, %c0_2] : memref<1x4x256xf32, #tpu.memory_space<vmem>>, vector<1x4x256xf32>
    %c0_3 = arith.constant 0 : index
    %c0_4 = arith.constant 0 : index
    %c0_5 = arith.constant 0 : index
    %4 = vector.load %arg3[%c0_3, %c0_4, %c0_5] : memref<1x4x1xf32, #tpu.memory_space<vmem>>, vector<1x4x1xf32>
    %cst = arith.constant dense<0.000000e+00> : vector<1x4xf32>
    %5 = vector.multi_reduction <add>, %3, %cst [2] : vector<1x4x256xf32> to vector<1x4xf32>
    %6 = vector.shape_cast %5 : vector<1x4xf32> to vector<1x4x1xf32>
    %7 = arith.addf %4, %6 : vector<1x4x1xf32>
    %c0_6 = arith.constant 0 : index
    %c0_7 = arith.constant 0 : index
    %c0_8 = arith.constant 0 : index
    %8 = vector.load %arg3[%c0_6, %c0_7, %c0_8] : memref<1x4x1xf32, #tpu.memory_space<vmem>>, vector<1x4x1xf32>
    tpu.vector_store %arg3[%c0_6, %c0_7, %c0_8], %7 {strides = array<i32>} : memref<1x4x1xf32, #tpu.memory_space<vmem>>, vector<1x4x1xf32>,
    %c0_9 = arith.constant 0 : index
    %c0_10 = arith.constant 0 : index
    %c0_11 = arith.constant 0 : index
    %9 = vector.load %arg4[%c0_9, %c0_10, %c0_11] : memref<1x4x1xf32, #tpu.memory_space<vmem>>, vector<1x4x1xf32>
    %10 = arith.mulf %3, %3 : vector<1x4x256xf32>
    %cst_12 = arith.constant dense<0.000000e+00> : vector<1x4xf32>
    %11 = vector.multi_reduction <add>, %10, %cst_12 [2] : vector<1x4x256xf32> to vector<1x4xf32>
    %12 = vector.shape_cast %11 : vector<1x4xf32> to vector<1x4x1xf32>
    %13 = arith.addf %9, %12 : vector<1x4x1xf32>
    %c0_13 = arith.constant 0 : index
    %c0_14 = arith.constant 0 : index
    %c0_15 = arith.constant 0 : index
    %14 = vector.load %arg4[%c0_13, %c0_14, %c0_15] : memref<1x4x1xf32, #tpu.memory_space<vmem>>, vector<1x4x1xf32>
    tpu.vector_store %arg4[%c0_13, %c0_14, %c0_15], %13 {strides = array<i32>} : memref<1x4x1xf32, #tpu.memory_space<vmem>>, vector<1x4x1xf32>,
    return
  }
  func.func @transform_0(%arg0: i32, %arg1: i32) -> (i32, i32, i32) {
    %c0_i32 = arith.constant 0 : i32
    %c0_i32_0 = arith.constant 0 : i32
    return %arg0, %c0_i32, %arg1 : i32, i32, i32
  }
  func.func @transform_1(%arg0: i32, %arg1: i32) -> (i32, i32, i32) {
    %c0_i32 = arith.constant 0 : i32
    %c0_i32_0 = arith.constant 0 : i32
    %c0_i32_1 = arith.constant 0 : i32
    return %arg0, %c0_i32, %c0_i32_0 : i32, i32, i32
  }
  func.func @transform_2(%arg0: i32, %arg1: i32) -> (i32, i32, i32) {
    %c0_i32 = arith.constant 0 : i32
    %c0_i32_0 = arith.constant 0 : i32
    %c0_i32_1 = arith.constant 0 : i32
    return %arg0, %c0_i32, %c0_i32_0 : i32, i32, i32
  }
}

module attributes {stable_mosaic.version = 11 : i64} {
  func.func @_norm_kernel(%arg0: i32, %arg1: i32, %arg2: memref<1x4x256xf32, #tpu.memory_space<vmem>>, %arg3: memref<1x4x1xf32, #tpu.memory_space<vmem>>, %arg4: memref<1x4x1xf32, #tpu.memory_space<vmem>>, %arg5: memref<1x4x256xf32, #tpu.memory_space<vmem>>) attributes {dimension_semantics = [#tpu.dimension_semantics<parallel>, #tpu.dimension_semantics<parallel>], iteration_bounds = array<i64: 2, 1>, scalar_prefetch = 0 : i64, scratch_operands = 0 : i64, tpu.core_type = #tpu.core_type<tc>, window_params = [{transform_indices = @transform_0, window_bounds = array<i64: 1, 4, 256>}, {transform_indices = @transform_1, window_bounds = array<i64: 1, 4, 1>}, {transform_indices = @transform_2, window_bounds = array<i64: 1, 4, 1>}, {transform_indices = @transform_3, window_bounds = array<i64: 1, 4, 256>}]} {
    %c0 = arith.constant 0 : index
    %c0_0 = arith.constant 0 : index
    %c0_1 = arith.constant 0 : index
    %0 = vector.load %arg2[%c0, %c0_0, %c0_1] : memref<1x4x256xf32, #tpu.memory_space<vmem>>, vector<1x4x256xf32>
    %c0_2 = arith.constant 0 : index
    %c0_3 = arith.constant 0 : index
    %c0_4 = arith.constant 0 : index
    %1 = vector.load %arg3[%c0_2, %c0_3, %c0_4] : memref<1x4x1xf32, #tpu.memory_space<vmem>>, vector<1x4x1xf32>
    %2 = vector.broadcast %1 : vector<1x4x1xf32> to vector<1x4x256xf32>
    %3 = arith.mulf %0, %2 : vector<1x4x256xf32>
    %c0_5 = arith.constant 0 : index
    %c0_6 = arith.constant 0 : index
    %c0_7 = arith.constant 0 : index
    %4 = vector.load %arg4[%c0_5, %c0_6, %c0_7] : memref<1x4x1xf32, #tpu.memory_space<vmem>>, vector<1x4x1xf32>
    %5 = vector.broadcast %4 : vector<1x4x1xf32> to vector<1x4x256xf32>
    %6 = arith.addf %3, %5 : vector<1x4x256xf32>
    %c0_8 = arith.constant 0 : index
    %c0_9 = arith.constant 0 : index
    %c0_10 = arith.constant 0 : index
    %7 = vector.load %arg5[%c0_8, %c0_9, %c0_10] : memref<1x4x256xf32, #tpu.memory_space<vmem>>, vector<1x4x256xf32>
    tpu.vector_store %arg5[%c0_8, %c0_9, %c0_10], %6 {strides = array<i32>} : memref<1x4x256xf32, #tpu.memory_space<vmem>>, vector<1x4x256xf32>,
    return
  }
  func.func @transform_0(%arg0: i32, %arg1: i32) -> (i32, i32, i32) {
    %c0_i32 = arith.constant 0 : i32
    %c0_i32_0 = arith.constant 0 : i32
    return %arg0, %c0_i32, %arg1 : i32, i32, i32
  }
  func.func @transform_1(%arg0: i32, %arg1: i32) -> (i32, i32, i32) {
    %c0_i32 = arith.constant 0 : i32
    %c0_i32_0 = arith.constant 0 : i32
    %c0_i32_1 = arith.constant 0 : i32
    return %arg0, %c0_i32, %c0_i32_0 : i32, i32, i32
  }
  func.func @transform_2(%arg0: i32, %arg1: i32) -> (i32, i32, i32) {
    %c0_i32 = arith.constant 0 : i32
    %c0_i32_0 = arith.constant 0 : i32
    %c0_i32_1 = arith.constant 0 : i32
    return %arg0, %c0_i32, %c0_i32_0 : i32, i32, i32
  }
  func.func @transform_3(%arg0: i32, %arg1: i32) -> (i32, i32, i32) {
    %c0_i32 = arith.constant 0 : i32
    %c0_i32_0 = arith.constant 0 : i32
    return %arg0, %c0_i32, %arg1 : i32, i32, i32
  }
}

</mosaic_0001>

<llo_original>
// kernel: _lambda_.3
$region0: #{_lambda_.3}
  #allocation0 [shape = 'u32[]', space=smem, size = 0x4, offset = 0x4, fixed_abs, tag = 'smem constant byte address 0x4 - core index']
  #allocation1 [shape = 'u32[144,128]{1,0:T(1,128)}', space=vmem, size = 0x12000, scoped, tag = 'internal scratch']
  %s0 = inlined_call_operand.vmem [shape: f32[2,4,256], index: 0, kind: input, shape index: {}]
  %s1 = inlined_call_operand.vmem [shape: f32[2,4,1], index: 1, kind: input, shape index: {}]
  %s2 = inlined_call_operand.vmem [shape: f32[2,4,1], index: 2, kind: input, shape index: {}]
  %s3 = inlined_call_operand.vmem [shape: f32[2,4,256], index: 3, kind: output, shape index: {}]
  %s4 = sld [smem:[#allocation0]]
  $region45: #{_lambda_.3} parent=0
    _
  %s6 = ssub.s32 1, %s4
  %s7 = scalar_select 0, %s6, %s4
  loop: start=0, step=1, limit=4
  $region2: #{_lambda_.3} parent=0 // loop_pre_header
    _
  $region3: #{_lambda_.3} parent=0 // loop_header
    %s9 = sphi 0, %s13
    %p10 = scmp.ge.s32.totalorder %s9, 4
    %s16 = sphi 0, %s28
    %s17 = sphi 0, %s24
    %s18 = sphi 0, %s16
    %s19 = sphi 0, %s17
    %s20 = sphi 0, %s18
    %s21 = sphi 0, %s19
    %s33 = sphi 0, %s35
    %s36 = sphi 0, %s33
    %s37 = sphi 0, %s36
    %s53 = sphi 0, %s37
    %s59 = sphi 0, %s61
    %s62 = sphi 0, %s59
    %s63 = sphi 0, %s62
    %s79 = sphi 0, %s63
    %s85 = sphi 0, %s87
    %s88 = sphi 0, %s85
    %s89 = sphi 0, %s88
    %s105 = sphi 0, %s89
    %s113 = sphi 0, %s115
    %s116 = sphi 0, %s113
    %s117 = sphi 0, %s116
    %s133 = sphi 0, %s117
  $region4: #{_lambda_.3} parent=0 // loop_header_branch
    %12 = sbr.rel (%p10) target = $region8
  $region5: #{_lambda_.3} parent=0 // loop_body
    %s14 = ssub.s32 %s9, 1
    %s15 = ssub.s32 %s9, 2
    %s22 = sadd.s32 1, %s17
    %p23 = scmp.ge.s32.totalorder %s22, 1
    %s24 = scalar_select %p23, 0, %s22
    %s25 = sadd.s32 1, %s16
    %s26 = scalar_select %p23, %s25, %s16
    %p27 = scmp.ge.s32.totalorder %s26, 2
    %s28 = scalar_select %p27, 0, %s26
    %s29 = ssub.s32 %s16, %s28
    %s30 = ssub.s32 %s17, %s24
    %s31 = sor.u32 %s29, %s30
    %p32 = scmp.eq.s32.totalorder %s31, 0
    %s34 = sadd.s32 %s33, 1
    %s35 = scalar_select %p32, %s33, %s34
    %p38 = pneg %p32
    %p39 = scmp.eq.s32.totalorder %s9, 1
    %p40 = por %p38, %p39
    %p41 = scmp.ne.s32.totalorder %s33, %s36
    %p42 = scmp.eq.s32.totalorder %s9, 0
    %p43 = por %p41, %p42
    %p44 = scmp.ne.s32.totalorder %s33, %s36
    %p45 = scmp.eq.s32.totalorder %s14, 1
    %p46 = por %p44, %p45
    %p47 = scmp.ne.s32.totalorder %s36, %s37
    %p48 = scmp.eq.s32.totalorder %s14, 0
    %p49 = por %p47, %p48
    %p50 = scmp.ne.s32.totalorder %s36, %s37
    %p51 = scmp.eq.s32.totalorder %s15, 1
    %p52 = por %p50, %p51
    %p54 = scmp.ne.s32.totalorder %s37, %s53
    %p55 = scmp.eq.s32.totalorder %s15, 0
    %p56 = por %p54, %p55
    %s57 = ssub.s32 %s16, %s28
    %p58 = scmp.eq.s32.totalorder %s57, 0
    %s60 = sadd.s32 %s59, 1
    %s61 = scalar_select %p58, %s59, %s60
    %p64 = pneg %p58
    %p65 = scmp.eq.s32.totalorder %s9, 1
    %p66 = por %p64, %p65
    %p67 = scmp.ne.s32.totalorder %s59, %s62
    %p68 = scmp.eq.s32.totalorder %s9, 0
    %p69 = por %p67, %p68
    %p70 = scmp.ne.s32.totalorder %s59, %s62
    %p71 = scmp.eq.s32.totalorder %s14, 1
    %p72 = por %p70, %p71
    %p73 = scmp.ne.s32.totalorder %s62, %s63
    %p74 = scmp.eq.s32.totalorder %s14, 0
    %p75 = por %p73, %p74
    %p76 = scmp.ne.s32.totalorder %s62, %s63
    %p77 = scmp.eq.s32.totalorder %s15, 1
    %p78 = por %p76, %p77
    %p80 = scmp.ne.s32.totalorder %s63, %s79
    %p81 = scmp.eq.s32.totalorder %s15, 0
    %p82 = por %p80, %p81
    %s83 = ssub.s32 %s16, %s28
    %p84 = scmp.eq.s32.totalorder %s83, 0
    %s86 = sadd.s32 %s85, 1
    %s87 = scalar_select %p84, %s85, %s86
    %p90 = pneg %p84
    %p91 = scmp.eq.s32.totalorder %s9, 1
    %p92 = por %p90, %p91
    %p93 = scmp.ne.s32.totalorder %s85, %s88
    %p94 = scmp.eq.s32.totalorder %s9, 0
    %p95 = por %p93, %p94
    %p96 = scmp.ne.s32.totalorder %s85, %s88
    %p97 = scmp.eq.s32.totalorder %s14, 1
    %p98 = por %p96, %p97
    %p99 = scmp.ne.s32.totalorder %s88, %s89
    %p100 = scmp.eq.s32.totalorder %s14, 0
    %p101 = por %p99, %p100
    %p102 = scmp.ne.s32.totalorder %s88, %s89
    %p103 = scmp.eq.s32.totalorder %s15, 1
    %p104 = por %p102, %p103
    %p106 = scmp.ne.s32.totalorder %s89, %s105
    %p107 = scmp.eq.s32.totalorder %s15, 0
    %p108 = por %p106, %p107
    %s109 = ssub.s32 %s16, %s28
    %s110 = ssub.s32 %s17, %s24
    %s111 = sor.u32 %s109, %s110
    %p112 = scmp.eq.s32.totalorder %s111, 0
    %s114 = sadd.s32 %s113, 1
    %s115 = scalar_select %p112, %s113, %s114
    %p118 = pneg %p112
    %p119 = scmp.eq.s32.totalorder %s9, 1
    %p120 = por %p118, %p119
    %p121 = scmp.ne.s32.totalorder %s113, %s116
    %p122 = scmp.eq.s32.totalorder %s9, 0
    %p123 = por %p121, %p122
    %p124 = scmp.ne.s32.totalorder %s113, %s116
    %p125 = scmp.eq.s32.totalorder %s14, 1
    %p126 = por %p124, %p125
    %p127 = scmp.ne.s32.totalorder %s116, %s117
    %p128 = scmp.eq.s32.totalorder %s14, 0
    %p129 = por %p127, %p128
    %p130 = scmp.ne.s32.totalorder %s116, %s117
    %p131 = scmp.eq.s32.totalorder %s15, 1
    %p132 = por %p130, %p131
    %p134 = scmp.ne.s32.totalorder %s117, %s133
    %p135 = scmp.eq.s32.totalorder %s15, 0
    %p136 = por %p134, %p135
    %p137 = scmp.le.s32.totalorder 1, %s9
    %p138 = scmp.lt.s32.totalorder %s9, 3
    %p139 = pnand %p137, %p138
    %p140 = pneg %p139
    // Predicated region
    $region9: #{_lambda_.3} parent=5 // pred_check
      _
    $region10: #{_lambda_.3} parent=5 // pred_check_branch
      %142 = sbr.rel (%p139) target = $region12
    $region11: #{_lambda_.3} parent=5 // pred_region
      %s143 = ssub.s32 %s9, 1
    $region12: #{_lambda_.3} parent=5 // pred_fallthru
      _
    %p144 = scmp.lt.s32.totalorder %s9, 2
    // Predicated region
    $region13: #{_lambda_.3} parent=5 // pred_check
      %p145 = pneg %p144
    $region14: #{_lambda_.3} parent=5 // pred_check_branch
      %147 = sbr.rel (%p145) target = $region16
    $region15: #{_lambda_.3} parent=5 // pred_region
      // Predicated region
      $region17: #{_lambda_.3} parent=15 // pred_check
        %p148 = pneg %p43
      $region18: #{_lambda_.3} parent=15 // pred_check_branch
        %150 = sbr.rel (%p148) target = $region20
      $region19: #{_lambda_.3} parent=15 // pred_region
        %s151 = smul.u32 2, %s17
        %p152 = scmp.lt.s32.totalorder %s16, 1
        %s153 = scalar_select %p152, %s16, 1
        %p154 = scmp.lt.s32.totalorder %s151, 1
        %s155 = scalar_select %p154, %s151, 1
        %s156 = smul.addr %s153, 2
        %s157 = sadd.s32 %s155, %s156
        %s158 = smul.addr %s157, 4
        %s159 = scalar_lea.vmem %s0, %s158
        %s160 = smul.u32 2, %s17
      $region20: #{_lambda_.3} parent=15 // pred_fallthru
        _
      // Predicated region
      $region21: #{_lambda_.3} parent=15 // pred_check
        %p161 = pneg %p69
      $region22: #{_lambda_.3} parent=15 // pred_check_branch
        %163 = sbr.rel (%p161) target = $region24
      $region23: #{_lambda_.3} parent=15 // pred_region
        %p164 = scmp.lt.s32.totalorder %s16, 1
        %s165 = scalar_select %p164, %s16, 1
        %s166 = smul.addr %s165, 4
        %s167 = scalar_lea.vmem %s1, %s166
      $region24: #{_lambda_.3} parent=15 // pred_fallthru
        _
      // Predicated region
      $region25: #{_lambda_.3} parent=15 // pred_check
        %p168 = pneg %p95
      $region26: #{_lambda_.3} parent=15 // pred_check_branch
        %170 = sbr.rel (%p168) target = $region28
      $region27: #{_lambda_.3} parent=15 // pred_region
        %p171 = scmp.lt.s32.totalorder %s16, 1
        %s172 = scalar_select %p171, %s16, 1
        %s173 = smul.addr %s172, 4
        %s174 = scalar_lea.vmem %s2, %s173
      $region28: #{_lambda_.3} parent=15 // pred_fallthru
        _
    $region16: #{_lambda_.3} parent=5 // pred_fallthru
      _
    %p175 = scmp.le.s32.totalorder 1, %s9
    %p176 = scmp.lt.s32.totalorder %s9, 3
    %p177 = pnand %p175, %p176
    %p178 = pneg %p177
    // Predicated region
    $region29: #{_lambda_.3} parent=5 // pred_check
      _
    $region30: #{_lambda_.3} parent=5 // pred_check_branch
      %180 = sbr.rel (%p177) target = $region32
    $region31: #{_lambda_.3} parent=5 // pred_region
      %s181 = ssub.s32 %s9, 1
      %s182 = smul.u32 2, %s19
      %p183 = scmp.lt.s32.totalorder %s18, 1
      %s184 = scalar_select %p183, %s18, 1
      %p185 = scmp.lt.s32.totalorder %s182, 1
      %s186 = scalar_select %p185, %s182, 1
      %s187 = smul.addr %s184, 2
      %s188 = sadd.s32 %s186, %s187
      %s189 = smul.addr %s188, 4
      %s190 = scalar_lea.vmem %s0, %s189
      %p191 = pneg %p49
      %p192 = pneg %p46
      %p193 = scmp.lt.s32.totalorder %s18, 1
      %s194 = scalar_select %p193, %s18, 1
      %s195 = smul.addr %s194, 4
      %s196 = scalar_lea.vmem %s1, %s195
      %p197 = pneg %p75
      %p198 = pneg %p72
      %p199 = scmp.lt.s32.totalorder %s18, 1
      %s200 = scalar_select %p199, %s18, 1
      %s201 = smul.addr %s200, 4
      %s202 = scalar_lea.vmem %s2, %s201
      %p203 = pneg %p101
      %p204 = pneg %p98
      %p205 = pneg %p129
      %p206 = pneg %p126
      %s207 = smul.u32 2, %s19
      %p208 = scmp.lt.s32.totalorder %s18, 1
      %s209 = scalar_select %p208, %s18, 1
      %p210 = scmp.lt.s32.totalorder %s207, 1
      %s211 = scalar_select %p210, %s207, 1
      %s212 = smul.addr %s209, 2
      %s213 = sadd.s32 %s211, %s212
      %s214 = smul.addr %s213, 4
      %s215 = scalar_lea.vmem %s3, %s214
      %s216 = smul.u32 2, %s19
      %p217 = scmp.lt.s32.totalorder %s18, 1
      %s218 = scalar_select %p217, %s18, 1
      %p219 = scmp.lt.s32.totalorder %s216, 1
      %s220 = scalar_select %p219, %s216, 1
      %s221 = smul.addr %s218, 2
      %s222 = sadd.s32 %s220, %s221
      %s223 = smul.addr %s222, 4
      %s224 = scalar_lea.vmem %s0, %s223
      %s225 = smul.u32 2, %s19
      %p226 = scmp.lt.s32.totalorder %s18, 1
      %s227 = scalar_select %p226, %s18, 1
      %s228 = smul.addr %s227, 4
      %s229 = scalar_lea.vmem %s1, %s228
      %p230 = scmp.lt.s32.totalorder %s18, 1
      %s231 = scalar_select %p230, %s18, 1
      %s232 = smul.addr %s231, 4
      %s233 = scalar_lea.vmem %s2, %s232
      %s234 = smul.u32 2, %s19
      %p235 = scmp.lt.s32.totalorder %s18, 1
      %s236 = scalar_select %p235, %s18, 1
      %p237 = scmp.lt.s32.totalorder %s234, 1
      %s238 = scalar_select %p237, %s234, 1
      %s239 = smul.addr %s236, 2
      %s240 = sadd.s32 %s238, %s239
      %s241 = smul.addr %s240, 4
      %s242 = scalar_lea.vmem %s3, %s241
      %s243 = smul.u32 2, %s19
      %v244 = vld [vmem:[%s224] sm:$0xff]
      %v245 = vld [vmem:[%s229] sm:$0xf]
      %247 = vset.pattern.permute.xlu0 0
      %248 = vperm.xlu0 %247, %v245
      %v249 = vpop.permute.xlu0 %248
      %v251 = vunpack.c.l.s4 839922192
      %v252 = vunpack.c.0.s8 %v251
      %v253 = vlaneseq
      %v254 = vshrl.u32 %v253, 7
      %v255 = vsub.s32 %v252, %v254
      %v256 = vrot.slane %v249, %v255
      %v258 = vmul.f32 %v244, %v256
      %v259 = vld [vmem:[%s233] sm:$0xf]
      %261 = vset.pattern.permute.xlu0 0
      %262 = vperm.xlu0 %261, %v259
      %v263 = vpop.permute.xlu0 %262
      %v265 = vunpack.c.l.s4 839922192
      %v266 = vunpack.c.0.s8 %v265
      %v267 = vlaneseq
      %v268 = vshrl.u32 %v267, 7
      %v269 = vsub.s32 %v266, %v268
      %v270 = vrot.slane %v263, %v269
      %v272 = vadd.f32 %v258, %v270
      %273 = vst [vmem:[%s242] sm:$0xff] %v272
      %s274 = smul.u32 2, %s19
      %p275 = scmp.lt.s32.totalorder %s18, 1
      %s276 = scalar_select %p275, %s18, 1
      %p277 = scmp.lt.s32.totalorder %s274, 1
      %s278 = scalar_select %p277, %s274, 1
      %s279 = smul.addr %s276, 2
      %s280 = sadd.s32 %s278, %s279
      %s281 = smul.addr %s280, 4
      %s282 = scalar_lea.vmem %s3, %s281
      // Predicated region
      $region33: #{_lambda_.3} parent=31 // pred_check
        %p283 = pneg %p126
      $region34: #{_lambda_.3} parent=31 // pred_check_branch
        %285 = sbr.rel (%p283) target = $region36
      $region35: #{_lambda_.3} parent=31 // pred_region
        %s286 = smul.u32 2, %s19
      $region36: #{_lambda_.3} parent=31 // pred_fallthru
        _
    $region32: #{_lambda_.3} parent=5 // pred_fallthru
      _
    %p287 = scmp.le.s32.totalorder 2, %s9
    // Predicated region
    $region37: #{_lambda_.3} parent=5 // pred_check
      %p288 = pneg %p287
    $region38: #{_lambda_.3} parent=5 // pred_check_branch
      %290 = sbr.rel (%p288) target = $region40
    $region39: #{_lambda_.3} parent=5 // pred_region
      %s291 = ssub.s32 %s9, 2
      // Predicated region
      $region41: #{_lambda_.3} parent=39 // pred_check
        %p292 = pneg %p132
      $region42: #{_lambda_.3} parent=39 // pred_check_branch
        %294 = sbr.rel (%p292) target = $region44
      $region43: #{_lambda_.3} parent=39 // pred_region
        %s295 = smul.u32 2, %s21
        %p296 = scmp.lt.s32.totalorder %s20, 1
        %s297 = scalar_select %p296, %s20, 1
        %p298 = scmp.lt.s32.totalorder %s295, 1
        %s299 = scalar_select %p298, %s295, 1
        %s300 = smul.addr %s297, 2
        %s301 = sadd.s32 %s299, %s300
        %s302 = smul.addr %s301, 4
        %s303 = scalar_lea.vmem %s3, %s302
      $region44: #{_lambda_.3} parent=39 // pred_fallthru
        _
    $region40: #{_lambda_.3} parent=5 // pred_fallthru
      _
  $region6: #{_lambda_.3} parent=0 // loop_footer
    %s13 = sadd.s32 1, %s9
  $region7: #{_lambda_.3} parent=0 // loop_footer_branch
    %8 = sbr.rel target = $region3
  $region8: #{_lambda_.3} parent=0 // loop_exit
    _

// kernel: _lambda_.2
$region0: #{_lambda_.2}
  #allocation0 [shape = 'u32[]', space=smem, size = 0x4, offset = 0x4, fixed_abs, tag = 'smem constant byte address 0x4 - core index']
  #allocation1 [shape = 'u32[144,128]{1,0:T(1,128)}', space=vmem, size = 0x12000, scoped, tag = 'internal scratch']
  %s0 = inlined_call_operand.vmem [shape: f32[2,4,256], index: 0, kind: input, shape index: {}]
  %s1 = inlined_call_operand.vmem [shape: f32[2,4,1], index: 1, kind: output, shape index: {0}]
  %s2 = inlined_call_operand.vmem [shape: f32[2,4,1], index: 2, kind: output, shape index: {1}]
  %3 = xla_tuple %s1, %s2
  %s4 = sld [smem:[#allocation0]]
  $region49: #{_lambda_.2} parent=0
    _
  %s6 = ssub.s32 1, %s4
  %s7 = scalar_select 0, %s6, %s4
  loop: start=0, step=1, limit=4
  $region2: #{_lambda_.2} parent=0 // loop_pre_header
    _
  $region3: #{_lambda_.2} parent=0 // loop_header
    %s9 = sphi 0, %s13
    %p10 = scmp.ge.s32.totalorder %s9, 4
    %s16 = sphi 0, %s28
    %s17 = sphi 0, %s24
    %s18 = sphi 0, %s16
    %s19 = sphi 0, %s17
    %s20 = sphi 0, %s18
    %s21 = sphi 0, %s19
    %s33 = sphi 0, %s35
    %s36 = sphi 0, %s33
    %s37 = sphi 0, %s36
    %s53 = sphi 0, %s37
    %s59 = sphi 0, %s61
    %s62 = sphi 0, %s59
    %s63 = sphi 0, %s62
    %s79 = sphi 0, %s63
    %s85 = sphi 0, %s87
    %s88 = sphi 0, %s85
    %s89 = sphi 0, %s88
    %s105 = sphi 0, %s89
  $region4: #{_lambda_.2} parent=0 // loop_header_branch
    %12 = sbr.rel (%p10) target = $region8
  $region5: #{_lambda_.2} parent=0 // loop_body
    %s14 = ssub.s32 %s9, 1
    %s15 = ssub.s32 %s9, 2
    %s22 = sadd.s32 1, %s17
    %p23 = scmp.ge.s32.totalorder %s22, 1
    %s24 = scalar_select %p23, 0, %s22
    %s25 = sadd.s32 1, %s16
    %s26 = scalar_select %p23, %s25, %s16
    %p27 = scmp.ge.s32.totalorder %s26, 2
    %s28 = scalar_select %p27, 0, %s26
    %s29 = ssub.s32 %s16, %s28
    %s30 = ssub.s32 %s17, %s24
    %s31 = sor.u32 %s29, %s30
    %p32 = scmp.eq.s32.totalorder %s31, 0
    %s34 = sadd.s32 %s33, 1
    %s35 = scalar_select %p32, %s33, %s34
    %p38 = pneg %p32
    %p39 = scmp.eq.s32.totalorder %s9, 1
    %p40 = por %p38, %p39
    %p41 = scmp.ne.s32.totalorder %s33, %s36
    %p42 = scmp.eq.s32.totalorder %s9, 0
    %p43 = por %p41, %p42
    %p44 = scmp.ne.s32.totalorder %s33, %s36
    %p45 = scmp.eq.s32.totalorder %s14, 1
    %p46 = por %p44, %p45
    %p47 = scmp.ne.s32.totalorder %s36, %s37
    %p48 = scmp.eq.s32.totalorder %s14, 0
    %p49 = por %p47, %p48
    %p50 = scmp.ne.s32.totalorder %s36, %s37
    %p51 = scmp.eq.s32.totalorder %s15, 1
    %p52 = por %p50, %p51
    %p54 = scmp.ne.s32.totalorder %s37, %s53
    %p55 = scmp.eq.s32.totalorder %s15, 0
    %p56 = por %p54, %p55
    %s57 = ssub.s32 %s16, %s28
    %p58 = scmp.eq.s32.totalorder %s57, 0
    %s60 = sadd.s32 %s59, 1
    %s61 = scalar_select %p58, %s59, %s60
    %p64 = pneg %p58
    %p65 = scmp.eq.s32.totalorder %s9, 1
    %p66 = por %p64, %p65
    %p67 = scmp.ne.s32.totalorder %s59, %s62
    %p68 = scmp.eq.s32.totalorder %s9, 0
    %p69 = por %p67, %p68
    %p70 = scmp.ne.s32.totalorder %s59, %s62
    %p71 = scmp.eq.s32.totalorder %s14, 1
    %p72 = por %p70, %p71
    %p73 = scmp.ne.s32.totalorder %s62, %s63
    %p74 = scmp.eq.s32.totalorder %s14, 0
    %p75 = por %p73, %p74
    %p76 = scmp.ne.s32.totalorder %s62, %s63
    %p77 = scmp.eq.s32.totalorder %s15, 1
    %p78 = por %p76, %p77
    %p80 = scmp.ne.s32.totalorder %s63, %s79
    %p81 = scmp.eq.s32.totalorder %s15, 0
    %p82 = por %p80, %p81
    %s83 = ssub.s32 %s16, %s28
    %p84 = scmp.eq.s32.totalorder %s83, 0
    %s86 = sadd.s32 %s85, 1
    %s87 = scalar_select %p84, %s85, %s86
    %p90 = pneg %p84
    %p91 = scmp.eq.s32.totalorder %s9, 1
    %p92 = por %p90, %p91
    %p93 = scmp.ne.s32.totalorder %s85, %s88
    %p94 = scmp.eq.s32.totalorder %s9, 0
    %p95 = por %p93, %p94
    %p96 = scmp.ne.s32.totalorder %s85, %s88
    %p97 = scmp.eq.s32.totalorder %s14, 1
    %p98 = por %p96, %p97
    %p99 = scmp.ne.s32.totalorder %s88, %s89
    %p100 = scmp.eq.s32.totalorder %s14, 0
    %p101 = por %p99, %p100
    %p102 = scmp.ne.s32.totalorder %s88, %s89
    %p103 = scmp.eq.s32.totalorder %s15, 1
    %p104 = por %p102, %p103
    %p106 = scmp.ne.s32.totalorder %s89, %s105
    %p107 = scmp.eq.s32.totalorder %s15, 0
    %p108 = por %p106, %p107
    %p109 = scmp.le.s32.totalorder 1, %s9
    %p110 = scmp.lt.s32.totalorder %s9, 3
    %p111 = pnand %p109, %p110
    %p112 = pneg %p111
    // Predicated region
    $region9: #{_lambda_.2} parent=5 // pred_check
      _
    $region10: #{_lambda_.2} parent=5 // pred_check_branch
      %114 = sbr.rel (%p111) target = $region12
    $region11: #{_lambda_.2} parent=5 // pred_region
      %s115 = ssub.s32 %s9, 1
    $region12: #{_lambda_.2} parent=5 // pred_fallthru
      _
    %p116 = scmp.lt.s32.totalorder %s9, 2
    // Predicated region
    $region13: #{_lambda_.2} parent=5 // pred_check
      %p117 = pneg %p116
    $region14: #{_lambda_.2} parent=5 // pred_check_branch
      %119 = sbr.rel (%p117) target = $region16
    $region15: #{_lambda_.2} parent=5 // pred_region
      // Predicated region
      $region17: #{_lambda_.2} parent=15 // pred_check
        %p120 = pneg %p43
      $region18: #{_lambda_.2} parent=15 // pred_check_branch
        %122 = sbr.rel (%p120) target = $region20
      $region19: #{_lambda_.2} parent=15 // pred_region
        %s123 = smul.u32 2, %s17
        %p124 = scmp.lt.s32.totalorder %s16, 1
        %s125 = scalar_select %p124, %s16, 1
        %p126 = scmp.lt.s32.totalorder %s123, 1
        %s127 = scalar_select %p126, %s123, 1
        %s128 = smul.addr %s125, 2
        %s129 = sadd.s32 %s127, %s128
        %s130 = smul.addr %s129, 4
        %s131 = scalar_lea.vmem %s0, %s130
        %s132 = smul.u32 2, %s17
      $region20: #{_lambda_.2} parent=15 // pred_fallthru
        _
    $region16: #{_lambda_.2} parent=5 // pred_fallthru
      _
    %p133 = scmp.le.s32.totalorder 1, %s9
    %p134 = scmp.lt.s32.totalorder %s9, 3
    %p135 = pnand %p133, %p134
    %p136 = pneg %p135
    // Predicated region
    $region21: #{_lambda_.2} parent=5 // pred_check
      _
    $region22: #{_lambda_.2} parent=5 // pred_check_branch
      %138 = sbr.rel (%p135) target = $region24
    $region23: #{_lambda_.2} parent=5 // pred_region
      %s139 = ssub.s32 %s9, 1
      %s140 = smul.u32 2, %s19
      %p141 = scmp.lt.s32.totalorder %s18, 1
      %s142 = scalar_select %p141, %s18, 1
      %p143 = scmp.lt.s32.totalorder %s140, 1
      %s144 = scalar_select %p143, %s140, 1
      %s145 = smul.addr %s142, 2
      %s146 = sadd.s32 %s144, %s145
      %s147 = smul.addr %s146, 4
      %s148 = scalar_lea.vmem %s0, %s147
      %p149 = pneg %p49
      %p150 = pneg %p46
      %p151 = pneg %p75
      %p152 = pneg %p72
      %p153 = scmp.lt.s32.totalorder %s18, 1
      %s154 = scalar_select %p153, %s18, 1
      %s155 = smul.addr %s154, 4
      %s156 = scalar_lea.vmem %s1, %s155
      %p157 = pneg %p101
      %p158 = pneg %p98
      %p159 = scmp.lt.s32.totalorder %s18, 1
      %s160 = scalar_select %p159, %s18, 1
      %s161 = smul.addr %s160, 4
      %s162 = scalar_lea.vmem %s2, %s161
      %s163 = smul.u32 2, %s19
      %p164 = scmp.lt.s32.totalorder %s18, 1
      %s165 = scalar_select %p164, %s18, 1
      %p166 = scmp.lt.s32.totalorder %s163, 1
      %s167 = scalar_select %p166, %s163, 1
      %s168 = smul.addr %s165, 2
      %s169 = sadd.s32 %s167, %s168
      %s170 = smul.addr %s169, 4
      %s171 = scalar_lea.vmem %s0, %s170
      %s172 = smul.u32 2, %s19
      %p173 = scmp.lt.s32.totalorder %s18, 1
      %s174 = scalar_select %p173, %s18, 1
      %s175 = smul.addr %s174, 4
      %s176 = scalar_lea.vmem %s1, %s175
      %p177 = scmp.lt.s32.totalorder %s18, 1
      %s178 = scalar_select %p177, %s18, 1
      %s179 = smul.addr %s178, 4
      %s180 = scalar_lea.vmem %s2, %s179
      %p181 = scmp.eq.s32.totalorder %s19, 0
      // Predicated region
      $region25: #{_lambda_.2} parent=23 // pred_check
        %p182 = pneg %p181
      $region26: #{_lambda_.2} parent=23 // pred_check_branch
        %184 = sbr.rel (%p182) target = $region28
      $region27: #{_lambda_.2} parent=23 // pred_region
        %vm185 = vcmask 3072
        %186 = vst.msk [vmem:[%s176] sm:$0xf] %vm185, 0.0
        %187 = vst.msk [vmem:[%s180] sm:$0xf] %vm185, 0.0
      $region28: #{_lambda_.2} parent=23 // pred_fallthru
        _
      %v188 = vld [vmem:[%s171] sm:$0xff]
      %v189 = vld [vmem:[%s176] sm:$0xf]
      %v191 = vcombine.high %v188, %v188
      %vm193 = vcmask 1043456
      %v194 = vsel %vm193, %v188, 0.0
      %v195 = vsel %vm193, %v191, 0.0
      %v196 = vadd.f32 %v194, %v195
      %197 = vadd.xlane.f32.xlu0 %v196
      %v198 = vpop.xlane.xlu0 %197
      %v199 = vadd.f32 %v189, %v198
      %vm200 = vcmask 3072
      %201 = vst.msk [vmem:[%s176] sm:$0xf] %vm200, %v199
      %v202 = vld [vmem:[%s180] sm:$0xf]
      %v203 = vmul.f32 %v188, %v188
      %v205 = vcombine.high %v203, %v203
      %v207 = vsel %vm193, %v203, 0.0
      %v208 = vsel %vm193, %v205, 0.0
      %v209 = vadd.f32 %v207, %v208
      %210 = vadd.xlane.f32.xlu0 %v209
      %v211 = vpop.xlane.xlu0 %210
      %v212 = vadd.f32 %v202, %v211
      %213 = vst.msk [vmem:[%s180] sm:$0xf] %vm200, %v212
      %p214 = scmp.lt.s32.totalorder %s18, 1
      %s215 = scalar_select %p214, %s18, 1
      %s216 = smul.addr %s215, 4
      %s217 = scalar_lea.vmem %s1, %s216
      %p218 = scmp.lt.s32.totalorder %s18, 1
      %s219 = scalar_select %p218, %s18, 1
      %s220 = smul.addr %s219, 4
      %s221 = scalar_lea.vmem %s2, %s220
      // Predicated region
      $region29: #{_lambda_.2} parent=23 // pred_check
        %p222 = pneg %p72
      $region30: #{_lambda_.2} parent=23 // pred_check_branch
        %224 = sbr.rel (%p222) target = $region32
      $region31: #{_lambda_.2} parent=23 // pred_region
        _
      $region32: #{_lambda_.2} parent=23 // pred_fallthru
        _
      // Predicated region
      $region33: #{_lambda_.2} parent=23 // pred_check
        %p225 = pneg %p98
      $region34: #{_lambda_.2} parent=23 // pred_check_branch
        %227 = sbr.rel (%p225) target = $region36
      $region35: #{_lambda_.2} parent=23 // pred_region
        _
      $region36: #{_lambda_.2} parent=23 // pred_fallthru
        _
    $region24: #{_lambda_.2} parent=5 // pred_fallthru
      _
    %p228 = scmp.le.s32.totalorder 2, %s9
    // Predicated region
    $region37: #{_lambda_.2} parent=5 // pred_check
      %p229 = pneg %p228
    $region38: #{_lambda_.2} parent=5 // pred_check_branch
      %231 = sbr.rel (%p229) target = $region40
    $region39: #{_lambda_.2} parent=5 // pred_region
      %s232 = ssub.s32 %s9, 2
      // Predicated region
      $region41: #{_lambda_.2} parent=39 // pred_check
        %p233 = pneg %p78
      $region42: #{_lambda_.2} parent=39 // pred_check_branch
        %235 = sbr.rel (%p233) target = $region44
      $region43: #{_lambda_.2} parent=39 // pred_region
        %p236 = scmp.lt.s32.totalorder %s20, 1
        %s237 = scalar_select %p236, %s20, 1
        %s238 = smul.addr %s237, 4
        %s239 = scalar_lea.vmem %s1, %s238
      $region44: #{_lambda_.2} parent=39 // pred_fallthru
        _
      // Predicated region
      $region45: #{_lambda_.2} parent=39 // pred_check
        %p240 = pneg %p104
      $region46: #{_lambda_.2} parent=39 // pred_check_branch
        %242 = sbr.rel (%p240) target = $region48
      $region47: #{_lambda_.2} parent=39 // pred_region
        %p243 = scmp.lt.s32.totalorder %s20, 1
        %s244 = scalar_select %p243, %s20, 1
        %s245 = smul.addr %s244, 4
        %s246 = scalar_lea.vmem %s2, %s245
      $region48: #{_lambda_.2} parent=39 // pred_fallthru
        _
    $region40: #{_lambda_.2} parent=5 // pred_fallthru
      _
  $region6: #{_lambda_.2} parent=0 // loop_footer
    %s13 = sadd.s32 1, %s9
  $region7: #{_lambda_.2} parent=0 // loop_footer_branch
    %8 = sbr.rel target = $region3
  $region8: #{_lambda_.2} parent=0 // loop_exit
    _

</llo_original>
